<compile_context>
chip_gen: v7x
topology: tpu7x:2x2x1
jax: 0.10.0
libtpu: 0.0.40
codegen_flags: <defaults>
</compile_context>

<pallas_src>
import functools

import jax
import jax.numpy as jnp
from jax import lax
from jax.experimental import pallas as pl
from jax.experimental.pallas import tpu as pltpu

IN_DIM = 10
HID_DIM = 64
OUT_DIM = 1
DROPOUT_P = 0.3

_KEEP_SCALE = 1.0 / (1.0 - DROPOUT_P)          # inverted-dropout scale (Python const)
_DROP_THRESH = int(DROPOUT_P * (1 << 31))      # drop if 31-bit hash < threshold
_M31 = 0x7FFFFFFF
_HASH_C = 0x45D9F3B                             # odd 32-bit hash multiplier


def _mlp_kernel(seed_ref, xt_ref, w1_ref, b1_ref, w2_ref, b2_ref, o_ref,
                *, training, tile_b):
    xT = xt_ref[...]                                                   # (10, TILE_B)

    # Layer 1.  PyTorch computes x @ W1.T + b1; feature-major that is W1 @ xT.
    h = jnp.dot(w1_ref[...], xT, preferred_element_type=jnp.float32)   # (64, TILE_B)
    h = jnp.maximum(h + b1_ref[...], 0.0)                              # bias (64,1) bcast + ReLU

    if training:
        # Inverted dropout via a stateless integer hash (portable: plain int32
        # VPU ops lower on TPU and in interpret mode, unlike pltpu.prng_*).
        col0 = pl.program_id(0) * tile_b                               # global batch offset
        rows = lax.broadcasted_iota(jnp.int32, h.shape, 0)
        cols = lax.broadcasted_iota(jnp.int32, h.shape, 1) + col0
        z = seed_ref[0] + cols * jnp.int32(HID_DIM) + rows             # unique per element/seed
        # Two rounds of xorshift-multiply, masked to 31 bits so >> acts logical.
        z = z & jnp.int32(_M31)
        z = ((z >> 16) ^ z) * jnp.int32(_HASH_C)
        z = z & jnp.int32(_M31)
        z = ((z >> 16) ^ z) * jnp.int32(_HASH_C)
        u = ((z >> 16) ^ z) & jnp.int32(_M31)                          # ~uniform in [0, 2^31)
        keep = u >= jnp.int32(_DROP_THRESH)
        h = jnp.where(keep, h * jnp.float32(_KEEP_SCALE), 0.0)

    # Layer 2: (1, 64) @ (64, TILE_B) -> (1, TILE_B); lane-dense output row.
    out = jnp.dot(w2_ref[...], h, preferred_element_type=jnp.float32)
    o_ref[...] = (out + b2_ref[...]).astype(o_ref.dtype)


def _round_up(n, m):
    return ((n + m - 1) // m) * m


def simple_mlp_forward(x, params, *, seed=0, training=True, max_tile_b=4096):
    """SimpleMLP forward as one Pallas call.

    params are in PyTorch layout: W1 (64, 10), b1 (64,), W2 (1, 64), b2 (1,).
    x is (B, 10) float32; returns (B, 1) float32.
    """
    w1, b1, w2, b2 = params
    B = x.shape[0]

    tile_b = min(max_tile_b, _round_up(max(B, 1), 128))   # lane-aligned batch tile
    bp = _round_up(B, tile_b)
    n_tiles = bp // tile_b

    # Feature-major: pad batch up to the tile boundary and put it on the lane axis.
    xt = jnp.zeros((IN_DIM, bp), jnp.float32).at[:, :B].set(x.T.astype(jnp.float32))
    w1c = w1.astype(jnp.float32)                      # (64, 10)
    b1c = b1.reshape(HID_DIM, 1).astype(jnp.float32)  # (64, 1) -> broadcast over lanes
    w2c = w2.astype(jnp.float32)                      # (1, 64)
    b2c = b2.reshape(1, OUT_DIM).astype(jnp.float32)  # (1, 1)
    seed_arr = jnp.asarray([seed], dtype=jnp.int32)

    kernel = functools.partial(_mlp_kernel, training=training, tile_b=tile_b)

    out_t = pl.pallas_call(
        kernel,
        out_shape=jax.ShapeDtypeStruct((OUT_DIM, bp), jnp.float32),
        grid_spec=pltpu.PrefetchScalarGridSpec(
            num_scalar_prefetch=1,                                       # seed -> SMEM
            grid=(n_tiles,),
            in_specs=[
                pl.BlockSpec((IN_DIM, tile_b), lambda i, seed: (0, i)),   # xT tile
                pl.BlockSpec((HID_DIM, IN_DIM), lambda i, seed: (0, 0)),  # W1
                pl.BlockSpec((HID_DIM, 1), lambda i, seed: (0, 0)),       # b1
                pl.BlockSpec((OUT_DIM, HID_DIM), lambda i, seed: (0, 0)), # W2
                pl.BlockSpec((1, OUT_DIM), lambda i, seed: (0, 0)),       # b2
            ],
            out_specs=pl.BlockSpec((OUT_DIM, tile_b), lambda i, seed: (0, i)),
        ),
        compiler_params=pltpu.CompilerParams(
            dimension_semantics=("parallel",)),
    )(seed_arr, xt, w1c, b1c, w2c, b2c)

    return out_t[:, :B].T                              # back to (B, 1)


def init_params(key):
    """Deterministic init in PyTorch nn.Linear layout and default bounds."""
    k1, k2, k3, k4 = jax.random.split(key, 4)
    bound1 = 1.0 / (IN_DIM ** 0.5)
    bound2 = 1.0 / (HID_DIM ** 0.5)
    w1 = jax.random.uniform(k1, (HID_DIM, IN_DIM), jnp.float32, -bound1, bound1)
    b1 = jax.random.uniform(k2, (HID_DIM,), jnp.float32, -bound1, bound1)
    w2 = jax.random.uniform(k3, (OUT_DIM, HID_DIM), jnp.float32, -bound2, bound2)
    b2 = jax.random.uniform(k4, (OUT_DIM,), jnp.float32, -bound2, bound2)
    return w1, b1, w2, b2


def _reference_eval(x, params):
    """Pure-JAX reference for the eval-mode (no dropout) path."""
    w1, b1, w2, b2 = params
    hp = jax.lax.Precision.HIGHEST
    h = jnp.maximum(jnp.dot(x, w1.T, precision=hp) + b1, 0.0)
    return jnp.dot(h, w2.T, precision=hp) + b2


if __name__ == "__main__":
    key = jax.random.PRNGKey(0)
    kx, kp = jax.random.split(key)
    params = init_params(kp)

    B = 8
    x = jax.random.normal(kx, (B, IN_DIM), dtype=jnp.float32)

    # Train-mode forward (dropout active, in-kernel hash PRNG).
    out_train = jax.block_until_ready(
        simple_mlp_forward(x, params, seed=0, training=True))
    assert out_train.shape == (B, OUT_DIM)
    assert bool(jnp.all(jnp.isfinite(out_train)))

    # Eval-mode forward (dropout is identity) — must match the pure-JAX reference.
    out_eval = jax.block_until_ready(simple_mlp_forward(x, params, training=False))
    ref = _reference_eval(x, params)
    assert jnp.allclose(out_eval, ref, atol=2e-3, rtol=2e-3), "mismatch vs reference"

    # Exercise the multi-tile grid + batch-padding path at a small size.
    B2 = 300
    x2 = jax.random.normal(jax.random.PRNGKey(1), (B2, IN_DIM), dtype=jnp.float32)
    out2 = jax.block_until_ready(
        simple_mlp_forward(x2, params, training=False, max_tile_b=128))
    ref2 = _reference_eval(x2, params)
    assert out2.shape == (B2, OUT_DIM)
    assert jnp.allclose(out2, ref2, atol=2e-3, rtol=2e-3), "mismatch vs reference (tiled)"

    print("KERNEL_OK")
</pallas_src>

<mosaic_0001>
module attributes {stable_mosaic.version = 11 : i64} {
  func.func @_mlp_kernel(%arg0: i32, %arg1: memref<1xi32, #tpu.memory_space<smem>>, %arg2: memref<10x128xf32, #tpu.memory_space<vmem>>, %arg3: memref<64x10xf32, #tpu.memory_space<vmem>>, %arg4: memref<64x1xf32, #tpu.memory_space<vmem>>, %arg5: memref<1x64xf32, #tpu.memory_space<vmem>>, %arg6: memref<1x1xf32, #tpu.memory_space<vmem>>, %arg7: memref<1x128xf32, #tpu.memory_space<vmem>>) attributes {dimension_semantics = [#tpu.dimension_semantics<parallel>], iteration_bounds = array<i64: 1>, scalar_prefetch = 1 : i64, scratch_operands = 0 : i64, tpu.core_type = #tpu.core_type<tc>, window_params = [{transform_indices = @transform_0, window_bounds = array<i64: 10, 128>}, {pipeline_mode = #tpu.pipeline_mode<synchronous>, transform_indices = @transform_1, window_bounds = array<i64: 64, 10>}, {pipeline_mode = #tpu.pipeline_mode<synchronous>, transform_indices = @transform_2, window_bounds = array<i64: 64, 1>}, {pipeline_mode = #tpu.pipeline_mode<synchronous>, transform_indices = @transform_3, window_bounds = array<i64: 1, 64>}, {pipeline_mode = #tpu.pipeline_mode<synchronous>, transform_indices = @transform_4, window_bounds = array<i64: 1, 1>}, {transform_indices = @transform_5, window_bounds = array<i64: 1, 128>}]} {
    %c0 = arith.constant 0 : index
    %c0_0 = arith.constant 0 : index
    %0 = vector.load %arg2[%c0, %c0_0] : memref<10x128xf32, #tpu.memory_space<vmem>>, vector<10x128xf32>
    %c0_1 = arith.constant 0 : index
    %c0_2 = arith.constant 0 : index
    %1 = vector.load %arg3[%c0_1, %c0_2] : memref<64x10xf32, #tpu.memory_space<vmem>>, vector<64x10xf32>
    %cst = arith.constant dense<0.000000e+00> : vector<64x128xf32>
    %2 = tpu.matmul %1, %0, %cst {dimension_numbers = #tpu.dot_dimension_numbers<[1], [0], [0], [1], [0, 0, 1, 1], [], []>} : vector<64x10xf32>, vector<10x128xf32>, vector<64x128xf32> -> vector<64x128xf32>
    %c0_3 = arith.constant 0 : index
    %c0_4 = arith.constant 0 : index
    %3 = vector.load %arg4[%c0_3, %c0_4] : memref<64x1xf32, #tpu.memory_space<vmem>>, vector<64x1xf32>
    %4 = vector.broadcast %3 : vector<64x1xf32> to vector<64x128xf32>
    %5 = arith.addf %2, %4 : vector<64x128xf32>
    %cst_5 = arith.constant 0.000000e+00 : f32
    %6 = vector.broadcast %cst_5 : f32 to vector<64x128xf32>
    %7 = arith.maximumf %5, %6 : vector<64x128xf32>
    %c128_i32 = arith.constant 128 : i32
    %8 = arith.muli %arg0, %c128_i32 : i32
    %9 = tpu.iota {dimensions = array<i32: 0>} : vector<64x128xi32>
    %10 = tpu.iota {dimensions = array<i32: 1>} : vector<64x128xi32>
    %11 = vector.broadcast %8 : i32 to vector<64x128xi32>
    %12 = arith.addi %10, %11 : vector<64x128xi32>
    %c0_6 = arith.constant 0 : index
    %13 = memref.load %arg1[%c0_6] : memref<1xi32, #tpu.memory_space<smem>>
    %c64_i32 = arith.constant 64 : i32
    %14 = vector.broadcast %c64_i32 : i32 to vector<64x128xi32>
    %15 = arith.muli %12, %14 : vector<64x128xi32>
    %16 = vector.broadcast %13 : i32 to vector<64x128xi32>
    %17 = arith.addi %16, %15 : vector<64x128xi32>
    %18 = arith.addi %17, %9 : vector<64x128xi32>
    %c2147483647_i32 = arith.constant 2147483647 : i32
    %19 = vector.broadcast %c2147483647_i32 : i32 to vector<64x128xi32>
    %20 = arith.andi %18, %19 : vector<64x128xi32>
    %c16_i32 = arith.constant 16 : i32
    %21 = vector.broadcast %c16_i32 : i32 to vector<64x128xi32>
    %22 = arith.shrsi %20, %21 : vector<64x128xi32>
    %23 = arith.xori %22, %20 : vector<64x128xi32>
    %c73244475_i32 = arith.constant 73244475 : i32
    %24 = vector.broadcast %c73244475_i32 : i32 to vector<64x128xi32>
    %25 = arith.muli %23, %24 : vector<64x128xi32>
    %c2147483647_i32_7 = arith.constant 2147483647 : i32
    %26 = vector.broadcast %c2147483647_i32_7 : i32 to vector<64x128xi32>
    %27 = arith.andi %25, %26 : vector<64x128xi32>
    %c16_i32_8 = arith.constant 16 : i32
    %28 = vector.broadcast %c16_i32_8 : i32 to vector<64x128xi32>
    %29 = arith.shrsi %27, %28 : vector<64x128xi32>
    %30 = arith.xori %29, %27 : vector<64x128xi32>
    %c73244475_i32_9 = arith.constant 73244475 : i32
    %31 = vector.broadcast %c73244475_i32_9 : i32 to vector<64x128xi32>
    %32 = arith.muli %30, %31 : vector<64x128xi32>
    %c16_i32_10 = arith.constant 16 : i32
    %33 = vector.broadcast %c16_i32_10 : i32 to vector<64x128xi32>
    %34 = arith.shrsi %32, %33 : vector<64x128xi32>
    %35 = arith.xori %34, %32 : vector<64x128xi32>
    %c2147483647_i32_11 = arith.constant 2147483647 : i32
    %36 = vector.broadcast %c2147483647_i32_11 : i32 to vector<64x128xi32>
    %37 = arith.andi %35, %36 : vector<64x128xi32>
    %c644245094_i32 = arith.constant 644245094 : i32
    %38 = vector.broadcast %c644245094_i32 : i32 to vector<64x128xi32>
    %39 = arith.cmpi sge, %37, %38 : vector<64x128xi32>
    %cst_12 = arith.constant 1.42857146 : f32
    %40 = vector.broadcast %cst_12 : f32 to vector<64x128xf32>
    %41 = arith.mulf %7, %40 : vector<64x128xf32>
    %cst_13 = arith.constant 0.000000e+00 : f32
    %42 = vector.broadcast %cst_13 : f32 to vector<64x128xf32>
    %43 = arith.select %39, %41, %42 : vector<64x128xi1>, vector<64x128xf32>
    %c0_14 = arith.constant 0 : index
    %c0_15 = arith.constant 0 : index
    %44 = vector.load %arg5[%c0_14, %c0_15] : memref<1x64xf32, #tpu.memory_space<vmem>>, vector<1x64xf32>
    %cst_16 = arith.constant dense<0.000000e+00> : vector<1x128xf32>
    %45 = tpu.matmul %44, %43, %cst_16 {dimension_numbers = #tpu.dot_dimension_numbers<[1], [0], [0], [1], [0, 0, 1, 1], [], []>} : vector<1x64xf32>, vector<64x128xf32>, vector<1x128xf32> -> vector<1x128xf32>
    %c0_17 = arith.constant 0 : index
    %c0_18 = arith.constant 0 : index
    %46 = vector.load %arg6[%c0_17, %c0_18] : memref<1x1xf32, #tpu.memory_space<vmem>>, vector<1x1xf32>
    %47 = vector.broadcast %46 : vector<1x1xf32> to vector<1x128xf32>
    %48 = arith.addf %45, %47 : vector<1x128xf32>
    %c0_19 = arith.constant 0 : index
    %c0_20 = arith.constant 0 : index
    %49 = vector.load %arg7[%c0_19, %c0_20] : memref<1x128xf32, #tpu.memory_space<vmem>>, vector<1x128xf32>
    tpu.vector_store %arg7[%c0_19, %c0_20], %48 {strides = array<i32>} : memref<1x128xf32, #tpu.memory_space<vmem>>, vector<1x128xf32>,
    return
  }
  func.func @transform_0(%arg0: i32, %arg1: memref<1xi32, #tpu.memory_space<smem>>) -> (i32, i32) {
    %c0_i32 = arith.constant 0 : i32
    %c0_i32_0 = arith.constant 0 : i32
    return %c0_i32, %arg0 : i32, i32
  }
  func.func @transform_1(%arg0: i32, %arg1: memref<1xi32, #tpu.memory_space<smem>>) -> (i32, i32) {
    %c0_i32 = arith.constant 0 : i32
    %c0_i32_0 = arith.constant 0 : i32
    %c0_i32_1 = arith.constant 0 : i32
    return %c0_i32, %c0_i32_0 : i32, i32
  }
  func.func @transform_2(%arg0: i32, %arg1: memref<1xi32, #tpu.memory_space<smem>>) -> (i32, i32) {
    %c0_i32 = arith.constant 0 : i32
    %c0_i32_0 = arith.constant 0 : i32
    %c0_i32_1 = arith.constant 0 : i32
    return %c0_i32, %c0_i32_0 : i32, i32
  }
  func.func @transform_3(%arg0: i32, %arg1: memref<1xi32, #tpu.memory_space<smem>>) -> (i32, i32) {
    %c0_i32 = arith.constant 0 : i32
    %c0_i32_0 = arith.constant 0 : i32
    %c0_i32_1 = arith.constant 0 : i32
    return %c0_i32, %c0_i32_0 : i32, i32
  }
  func.func @transform_4(%arg0: i32, %arg1: memref<1xi32, #tpu.memory_space<smem>>) -> (i32, i32) {
    %c0_i32 = arith.constant 0 : i32
    %c0_i32_0 = arith.constant 0 : i32
    %c0_i32_1 = arith.constant 0 : i32
    return %c0_i32, %c0_i32_0 : i32, i32
  }
  func.func @transform_5(%arg0: i32, %arg1: memref<1xi32, #tpu.memory_space<smem>>) -> (i32, i32) {
    %c0_i32 = arith.constant 0 : i32
    %c0_i32_0 = arith.constant 0 : i32
    return %c0_i32, %arg0 : i32, i32
  }
}

</mosaic_0001>

<llo_original>
// kernel: tpu_custom_call.1
$region0: #{tpu_custom_call.1}
  #allocation0 [shape = 'u32[]', space=smem, size = 0x4, offset = 0x4, fixed_abs, tag = 'smem constant byte address 0x4 - core index']
  #allocation1 [shape = 'u32[144,128]{1,0:T(1,128)}', space=vmem, size = 0x12000, scoped, tag = 'internal scratch']
  #allocation2 [shape = 's32[1]{0}', space=sflag, size = 0x4, scoped, tag = 'scoped memory for tpu_custom_call.1']
  #allocation3 [shape = 's32[1]{0:T(128)S(6)}', space=smem, size = 0x200, scoped, tag = 'prefetched SMEM operand 0']
  #allocation4 [shape = 'f32[1,1]{1,0:T(1,128)S(1)}', space=vmem, size = 0x200, scoped, tag = 'scoped memory for tpu_custom_call.1']
  %s0 = inlined_call_operand.<no memory space> [shape: s32[1], index: 0, kind: input, shape index: {}]
  %s1 = inlined_call_operand.vmem [shape: f32[10,128], index: 1, kind: input, shape index: {}]
  %s2 = inlined_call_operand.vmem [shape: f32[64,10], index: 2, kind: input, shape index: {}]
  %s3 = inlined_call_operand.vmem [shape: f32[64,1], index: 3, kind: input, shape index: {}]
  %s4 = inlined_call_operand.vmem [shape: f32[1,64], index: 4, kind: input, shape index: {}]
  %s5 = inlined_call_operand.<no memory space> [shape: f32[1,1], index: 5, kind: input, shape index: {}]
  %s6 = inlined_call_operand.hbm [shape: f32[1,128], index: 6, kind: output, shape index: {}]
  %s7 = sld [smem:[#allocation0]]
  $region30: #{tpu_custom_call.1} parent=0
    _
  %s9 = ssub.s32 1, %s7
  %s10 = scalar_select 0, %s9, %s7
  %11 = sst [smem:[#allocation3]] %s0
  %v12 = vstv %s5
  %13 = vst [vmem:[#allocation4] sm:$0x1] %v12
  $region1: #{tpu_custom_call.1} parent=0
    #allocation5 [shape = 'u8[512]{0}', space=vmem, size = 0x400, scoped, tag = 'output window, operand 0, single buffered']
    #allocation6 [shape = 's32[1]{0}', space=sflag, size = 0x4, scoped, tag = 'scoped memory for tpu_custom_call.1']
    %14 = vsyncpa [#allocation6], 0
    // Predicated region
    $region2: #{tpu_custom_call.1} parent=1 // pred_check
      _
    $region3: #{tpu_custom_call.1} parent=1 // pred_check_branch
      %16 = sbr.rel (0) target = $region5
    $region4: #{tpu_custom_call.1} parent=1 // pred_region
      _
    $region5: #{tpu_custom_call.1} parent=1 // pred_fallthru
      _
    // Predicated region
    $region6: #{tpu_custom_call.1} parent=1 // pred_check
      _
    $region7: #{tpu_custom_call.1} parent=1 // pred_check_branch
      %18 = sbr.rel (0) target = $region9
    $region8: #{tpu_custom_call.1} parent=1 // pred_region
      _
    $region9: #{tpu_custom_call.1} parent=1 // pred_fallthru
      _
    // Predicated region
    $region10: #{tpu_custom_call.1} parent=1 // pred_check
      _
    $region11: #{tpu_custom_call.1} parent=1 // pred_check_branch
      %20 = sbr.rel (0) target = $region13
    $region12: #{tpu_custom_call.1} parent=1 // pred_region
      _
    $region13: #{tpu_custom_call.1} parent=1 // pred_fallthru
      _
    // Predicated region
    $region14: #{tpu_custom_call.1} parent=1 // pred_check
      _
    $region15: #{tpu_custom_call.1} parent=1 // pred_check_branch
      %22 = sbr.rel (0) target = $region17
    $region16: #{tpu_custom_call.1} parent=1 // pred_region
      _
    $region17: #{tpu_custom_call.1} parent=1 // pred_fallthru
      _
    // Predicated region
    $region18: #{tpu_custom_call.1} parent=1 // pred_check
      _
    $region19: #{tpu_custom_call.1} parent=1 // pred_check_branch
      %24 = sbr.rel (0) target = $region21
    $region20: #{tpu_custom_call.1} parent=1 // pred_region
      _
    $region21: #{tpu_custom_call.1} parent=1 // pred_fallthru
      _
    %v25 = vld [vmem:[%s1] sm:$0xff]
    %v26 = vld [vmem:[%s1 + $0x8] sm:$0x3]
    %v27 = vld [vmem:[%s2] sm:$0xff]
    %v28 = vld [vmem:[%s2 + $0x8] sm:$0xff]
    %v29 = vld [vmem:[%s2 + $0x10] sm:$0xff]
    %v30 = vld [vmem:[%s2 + $0x18] sm:$0xff]
    %v31 = vld [vmem:[%s2 + $0x20] sm:$0xff]
    %v32 = vld [vmem:[%s2 + $0x28] sm:$0xff]
    %v33 = vld [vmem:[%s2 + $0x30] sm:$0xff]
    %v34 = vld [vmem:[%s2 + $0x38] sm:$0xff]
    %v35 = vld [vmem:[%s3] sm:$0xff]
    %v36 = vld [vmem:[%s3 + $0x8] sm:$0xff]
    %v37 = vld [vmem:[%s3 + $0x10] sm:$0xff]
    %v38 = vld [vmem:[%s3 + $0x18] sm:$0xff]
    %v39 = vld [vmem:[%s3 + $0x20] sm:$0xff]
    %v40 = vld [vmem:[%s3 + $0x28] sm:$0xff]
    %v41 = vld [vmem:[%s3 + $0x30] sm:$0xff]
    %v42 = vld [vmem:[%s3 + $0x38] sm:$0xff]
    %44 = vset.pattern.permute.xlu0 0
    %45 = vperm.xlu0 %44, %v35
    %v46 = vpop.permute.xlu0 %45
    %49 = vset.pattern.permute.xlu0 0
    %50 = vperm.xlu0 %49, %v36
    %v51 = vpop.permute.xlu0 %50
    %54 = vset.pattern.permute.xlu0 0
    %55 = vperm.xlu0 %54, %v37
    %v56 = vpop.permute.xlu0 %55
    %59 = vset.pattern.permute.xlu0 0
    %60 = vperm.xlu0 %59, %v38
    %v61 = vpop.permute.xlu0 %60
    %64 = vset.pattern.permute.xlu0 0
    %65 = vperm.xlu0 %64, %v39
    %v66 = vpop.permute.xlu0 %65
    %69 = vset.pattern.permute.xlu0 0
    %70 = vperm.xlu0 %69, %v40
    %v71 = vpop.permute.xlu0 %70
    %74 = vset.pattern.permute.xlu0 0
    %75 = vperm.xlu0 %74, %v41
    %v76 = vpop.permute.xlu0 %75
    %79 = vset.pattern.permute.xlu0 0
    %80 = vperm.xlu0 %79, %v42
    %v81 = vpop.permute.xlu0 %80
    %vm83 = vcmask 80896
    %v85 = vsel %vm83, %v27, 0
    %v88 = vsel %vm83, %v28, 0
    %v91 = vsel %vm83, %v29, 0
    %v94 = vsel %vm83, %v30, 0
    %v97 = vsel %vm83, %v31, 0
    %v100 = vsel %vm83, %v32, 0
    %v103 = vsel %vm83, %v33, 0
    %v106 = vsel %vm83, %v34, 0
    %vm108 = vcmask 1041408
    %v110 = vsel %vm108, %v26, 0
    %112 = vmatprep.subr.mxu0 0.0
    %113 = vmatpush1.msra.mxu0 %v25
    %114 = vmatprep.subr.mxu0 0.0
    %115 = vmatpush1.msra.mxu0 %v110
    %116 = vmatprep.subr.mxu0 0.0
    %117 = vmatpush1.msra.mxu0 0.0
    %118 = vmatprep.subr.mxu0 0.0
    %119 = vmatpush1.msra.mxu0 0.0
    %120 = vmatprep.subr.mxu0 0.0
    %121 = vmatpush1.msra.mxu0 0.0
    %122 = vmatprep.subr.mxu0 0.0
    %123 = vmatpush1.msra.mxu0 0.0
    %124 = vmatprep.subr.mxu0 0.0
    %125 = vmatpush1.msra.mxu0 0.0
    %126 = vmatprep.subr.mxu0 0.0
    %127 = vmatpush1.msra.mxu0 0.0
    %128 = vmatprep.subr.mxu0 0.0
    %129 = vmatpush1.msra.mxu0 0.0
    %130 = vmatprep.subr.mxu0 0.0
    %131 = vmatpush1.msra.mxu0 0.0
    %132 = vmatprep.subr.mxu0 0.0
    %133 = vmatpush1.msra.mxu0 0.0
    %134 = vmatprep.subr.mxu0 0.0
    %135 = vmatpush1.msra.mxu0 0.0
    %136 = vmatprep.subr.mxu0 0.0
    %137 = vmatpush1.msra.mxu0 0.0
    %138 = vmatprep.subr.mxu0 0.0
    %139 = vmatpush1.msra.mxu0 0.0
    %140 = vmatprep.subr.mxu0 0.0
    %141 = vmatpush1.msra.mxu0 0.0
    %142 = vmatprep.subr.mxu0 0.0
    %143 = vmatpush1.msra.mxu0 0.0
    %144 = vmatprep.subr.mxu0 0.0
    %145 = vmatpush1.msra.mxu0 0.0
    %146 = vmatprep.subr.mxu0 0.0
    %147 = vmatpush1.msra.mxu0 0.0
    %148 = vmatprep.subr.mxu0 0.0
    %149 = vmatpush1.msra.mxu0 0.0
    %150 = vmatprep.subr.mxu0 0.0
    %151 = vmatpush1.msra.mxu0 0.0
    %152 = vmatprep.subr.mxu0 0.0
    %153 = vmatpush1.msra.mxu0 0.0
    %154 = vmatprep.subr.mxu0 0.0
    %155 = vmatpush1.msra.mxu0 0.0
    %156 = vmatprep.subr.mxu0 0.0
    %157 = vmatpush1.msra.mxu0 0.0
    %158 = vmatprep.subr.mxu0 0.0
    %159 = vmatpush1.msra.mxu0 0.0
    %160 = vmatprep.subr.mxu0 0.0
    %161 = vmatpush1.msra.mxu0 0.0
    %162 = vmatprep.subr.mxu0 0.0
    %163 = vmatpush1.msra.mxu0 0.0
    %164 = vmatprep.subr.mxu0 0.0
    %165 = vmatpush1.msra.mxu0 0.0
    %166 = vmatprep.subr.mxu0 0.0
    %167 = vmatpush1.msra.mxu0 0.0
    %168 = vmatprep.subr.mxu0 0.0
    %169 = vmatpush1.msra.mxu0 0.0
    %170 = vmatprep.subr.mxu0 0.0
    %171 = vmatpush1.msra.mxu0 0.0
    %172 = vmatprep.subr.mxu0 0.0
    %173 = vmatpush1.msra.mxu0 0.0
    %174 = vmatprep.subr.mxu0 0.0
    %175 = vmatpush1.msra.mxu0 0.0
    %176 = vmatprep.mubr.f32.mxu0 0.0
    %177 = vmatmul.mubr.f32.gmra.mrb[0].mxu0 %v85
    %v178 = vpop.f32.mrb[0].mxu0
    %v179 = vadd.f32 %v46, %v178
    %v180 = vpop.f32.mrb[0].mxu0
    %181 = vmatprep.mubr.f32.mxu0 0.0
    %182 = vmatmul.mubr.f32.gmra.mrb[0].mxu0 %v88
    %v183 = vpop.f32.mrb[0].mxu0
    %v184 = vadd.f32 %v51, %v183
    %v185 = vpop.f32.mrb[0].mxu0
    %186 = vmatprep.mubr.f32.mxu0 0.0
    %187 = vmatmul.mubr.f32.gmra.mrb[0].mxu0 %v91
    %v188 = vpop.f32.mrb[0].mxu0
    %v189 = vadd.f32 %v56, %v188
    %v190 = vpop.f32.mrb[0].mxu0
    %191 = vmatprep.mubr.f32.mxu0 0.0
    %192 = vmatmul.mubr.f32.gmra.mrb[0].mxu0 %v94
    %v193 = vpop.f32.mrb[0].mxu0
    %v194 = vadd.f32 %v61, %v193
    %v195 = vpop.f32.mrb[0].mxu0
    %196 = vmatprep.mubr.f32.mxu0 0.0
    %197 = vmatmul.mubr.f32.gmra.mrb[0].mxu0 %v97
    %v198 = vpop.f32.mrb[0].mxu0
    %v199 = vadd.f32 %v66, %v198
    %v200 = vpop.f32.mrb[0].mxu0
    %201 = vmatprep.mubr.f32.mxu0 0.0
    %202 = vmatmul.mubr.f32.gmra.mrb[0].mxu0 %v100
    %v203 = vpop.f32.mrb[0].mxu0
    %v204 = vadd.f32 %v71, %v203
    %v205 = vpop.f32.mrb[0].mxu0
    %206 = vmatprep.mubr.f32.mxu0 0.0
    %207 = vmatmul.mubr.f32.gmra.mrb[0].mxu0 %v103
    %v208 = vpop.f32.mrb[0].mxu0
    %v209 = vadd.f32 %v76, %v208
    %v210 = vpop.f32.mrb[0].mxu0
    %211 = vmatprep.mubr.f32.mxu0 0.0
    %212 = vmatmul.mubr.f32.gmra.mrb[0].mxu0 %v106
    %v213 = vpop.f32.mrb[0].mxu0
    %v214 = vadd.f32 %v81, %v213
    %v215 = vpop.f32.mrb[0].mxu0
    %216 = vdwg.mxu0
    %v217 = vmax.f32 %v179, 0.0
    %v218 = vmax.f32 %v184, 0.0
    %v219 = vmax.f32 %v189, 0.0
    %v220 = vmax.f32 %v194, 0.0
    %v221 = vmax.f32 %v199, 0.0
    %v222 = vmax.f32 %v204, 0.0
    %v223 = vmax.f32 %v209, 0.0
    %v224 = vmax.f32 %v214, 0.0
    %s225 = smul.u32 0, 128
    %v226 = vlaneseq
    %v227 = vshrl.u32 %v226, 7
    %v228 = vadd.s32 %v227, 8
    %v229 = vadd.s32 %v227, 16
    %v230 = vadd.s32 %v227, 24
    %v231 = vadd.s32 %v227, 32
    %v232 = vadd.s32 %v227, 40
    %v233 = vadd.s32 %v227, 48
    %v234 = vadd.s32 %v227, 56
    %v235 = vlaneseq
    %v236 = vand.u32 %v235, 127
    %v237 = vstv %s225
    %v238 = vadd.s32 %v236, %v237
    %s239 = sld [smem:[#allocation3]]
    %v240 = vmul.u32 %v238, 64
    %v241 = vstv %s239
    %v242 = vadd.s32 %v241, %v240
    %v243 = vadd.s32 %v242, %v227
    %v244 = vadd.s32 %v242, %v228
    %v245 = vadd.s32 %v242, %v229
    %v246 = vadd.s32 %v242, %v230
    %v247 = vadd.s32 %v242, %v231
    %v248 = vadd.s32 %v242, %v232
    %v249 = vadd.s32 %v242, %v233
    %v250 = vadd.s32 %v242, %v234
    %v251 = vand.u32 %v243, 2147483647
    %v252 = vand.u32 %v244, 2147483647
    %v253 = vand.u32 %v245, 2147483647
    %v254 = vand.u32 %v246, 2147483647
    %v255 = vand.u32 %v247, 2147483647
    %v256 = vand.u32 %v248, 2147483647
    %v257 = vand.u32 %v249, 2147483647
    %v258 = vand.u32 %v250, 2147483647
    %v259 = vshra.s32 %v251, 16
    %v260 = vshra.s32 %v252, 16
    %v261 = vshra.s32 %v253, 16
    %v262 = vshra.s32 %v254, 16
    %v263 = vshra.s32 %v255, 16
    %v264 = vshra.s32 %v256, 16
    %v265 = vshra.s32 %v257, 16
    %v266 = vshra.s32 %v258, 16
    %v267 = vxor.u32 %v259, %v251
    %v268 = vxor.u32 %v260, %v252
    %v269 = vxor.u32 %v261, %v253
    %v270 = vxor.u32 %v262, %v254
    %v271 = vxor.u32 %v263, %v255
    %v272 = vxor.u32 %v264, %v256
    %v273 = vxor.u32 %v265, %v257
    %v274 = vxor.u32 %v266, %v258
    %v275 = vmul.u32 %v267, 73244475
    %v276 = vmul.u32 %v268, 73244475
    %v277 = vmul.u32 %v269, 73244475
    %v278 = vmul.u32 %v270, 73244475
    %v279 = vmul.u32 %v271, 73244475
    %v280 = vmul.u32 %v272, 73244475
    %v281 = vmul.u32 %v273, 73244475
    %v282 = vmul.u32 %v274, 73244475
    %v283 = vand.u32 %v275, 2147483647
    %v284 = vand.u32 %v276, 2147483647
    %v285 = vand.u32 %v277, 2147483647
    %v286 = vand.u32 %v278, 2147483647
    %v287 = vand.u32 %v279, 2147483647
    %v288 = vand.u32 %v280, 2147483647
    %v289 = vand.u32 %v281, 2147483647
    %v290 = vand.u32 %v282, 2147483647
    %v291 = vshra.s32 %v283, 16
    %v292 = vshra.s32 %v284, 16
    %v293 = vshra.s32 %v285, 16
    %v294 = vshra.s32 %v286, 16
    %v295 = vshra.s32 %v287, 16
    %v296 = vshra.s32 %v288, 16
    %v297 = vshra.s32 %v289, 16
    %v298 = vshra.s32 %v290, 16
    %v299 = vxor.u32 %v291, %v283
    %v300 = vxor.u32 %v292, %v284
    %v301 = vxor.u32 %v293, %v285
    %v302 = vxor.u32 %v294, %v286
    %v303 = vxor.u32 %v295, %v287
    %v304 = vxor.u32 %v296, %v288
    %v305 = vxor.u32 %v297, %v289
    %v306 = vxor.u32 %v298, %v290
    %v307 = vmul.u32 %v299, 73244475
    %v308 = vmul.u32 %v300, 73244475
    %v309 = vmul.u32 %v301, 73244475
    %v310 = vmul.u32 %v302, 73244475
    %v311 = vmul.u32 %v303, 73244475
    %v312 = vmul.u32 %v304, 73244475
    %v313 = vmul.u32 %v305, 73244475
    %v314 = vmul.u32 %v306, 73244475
    %v315 = vshra.s32 %v307, 16
    %v316 = vshra.s32 %v308, 16
    %v317 = vshra.s32 %v309, 16
    %v318 = vshra.s32 %v310, 16
    %v319 = vshra.s32 %v311, 16
    %v320 = vshra.s32 %v312, 16
    %v321 = vshra.s32 %v313, 16
    %v322 = vshra.s32 %v314, 16
    %v323 = vxor.u32 %v315, %v307
    %v324 = vxor.u32 %v316, %v308
    %v325 = vxor.u32 %v317, %v309
    %v326 = vxor.u32 %v318, %v310
    %v327 = vxor.u32 %v319, %v311
    %v328 = vxor.u32 %v320, %v312
    %v329 = vxor.u32 %v321, %v313
    %v330 = vxor.u32 %v322, %v314
    %v331 = vand.u32 %v323, 2147483647
    %v332 = vand.u32 %v324, 2147483647
    %v333 = vand.u32 %v325, 2147483647
    %v334 = vand.u32 %v326, 2147483647
    %v335 = vand.u32 %v327, 2147483647
    %v336 = vand.u32 %v328, 2147483647
    %v337 = vand.u32 %v329, 2147483647
    %v338 = vand.u32 %v330, 2147483647
    %vm339 = vcmp.ge.s32.totalorder %v331, 644245094
    %vm340 = vcmp.ge.s32.totalorder %v332, 644245094
    %vm341 = vcmp.ge.s32.totalorder %v333, 644245094
    %vm342 = vcmp.ge.s32.totalorder %v334, 644245094
    %vm343 = vcmp.ge.s32.totalorder %v335, 644245094
    %vm344 = vcmp.ge.s32.totalorder %v336, 644245094
    %vm345 = vcmp.ge.s32.totalorder %v337, 644245094
    %vm346 = vcmp.ge.s32.totalorder %v338, 644245094
    %v347 = vmul.f32 %v217, 1.4285715
    %v348 = vmul.f32 %v218, 1.4285715
    %v349 = vmul.f32 %v219, 1.4285715
    %v350 = vmul.f32 %v220, 1.4285715
    %v351 = vmul.f32 %v221, 1.4285715
    %v352 = vmul.f32 %v222, 1.4285715
    %v353 = vmul.f32 %v223, 1.4285715
    %v354 = vmul.f32 %v224, 1.4285715
    %v355 = vsel %vm339, %v347, 0.0
    %v356 = vsel %vm340, %v348, 0.0
    %v357 = vsel %vm341, %v349, 0.0
    %v358 = vsel %vm342, %v350, 0.0
    %v359 = vsel %vm343, %v351, 0.0
    %v360 = vsel %vm344, %v352, 0.0
    %v361 = vsel %vm345, %v353, 0.0
    %v362 = vsel %vm346, %v354, 0.0
    %v363 = vld [vmem:[%s4] sm:$0x1]
    %v364 = vld [vmem:[#allocation4] sm:$0x1]
    %366 = vset.pattern.permute.xlu0 0
    %367 = vperm.xlu0 %366, %v364
    %v368 = vpop.permute.xlu0 %367
    %v370 = vlaneseq
    %v371 = vshrl.u32 %v370, 7
    %v372 = vsub.s32 0, %v371
    %v373 = vrot.slane %v368, %v372
    %vm374 = vcmask 523264
    %v376 = vsel %vm374, %v363, 0
    %378 = vmatprep.subr.mxu0 0.0
    %379 = vmatpush1.msra.mxu0 %v355
    %380 = vmatprep.subr.mxu0 0.0
    %381 = vmatpush1.msra.mxu0 %v356
    %382 = vmatprep.subr.mxu0 0.0
    %383 = vmatpush1.msra.mxu0 %v357
    %384 = vmatprep.subr.mxu0 0.0
    %385 = vmatpush1.msra.mxu0 %v358
    %386 = vmatprep.subr.mxu0 0.0
    %387 = vmatpush1.msra.mxu0 %v359
    %388 = vmatprep.subr.mxu0 0.0
    %389 = vmatpush1.msra.mxu0 %v360
    %390 = vmatprep.subr.mxu0 0.0
    %391 = vmatpush1.msra.mxu0 %v361
    %392 = vmatprep.subr.mxu0 0.0
    %393 = vmatpush1.msra.mxu0 %v362
    %394 = vmatprep.subr.mxu0 0.0
    %395 = vmatpush1.msra.mxu0 0.0
    %396 = vmatprep.subr.mxu0 0.0
    %397 = vmatpush1.msra.mxu0 0.0
    %398 = vmatprep.subr.mxu0 0.0
    %399 = vmatpush1.msra.mxu0 0.0
    %400 = vmatprep.subr.mxu0 0.0
    %401 = vmatpush1.msra.mxu0 0.0
    %402 = vmatprep.subr.mxu0 0.0
    %403 = vmatpush1.msra.mxu0 0.0
    %404 = vmatprep.subr.mxu0 0.0
    %405 = vmatpush1.msra.mxu0 0.0
    %406 = vmatprep.subr.mxu0 0.0
    %407 = vmatpush1.msra.mxu0 0.0
    %408 = vmatprep.subr.mxu0 0.0
    %409 = vmatpush1.msra.mxu0 0.0
    %410 = vmatprep.subr.mxu0 0.0
    %411 = vmatpush1.msra.mxu0 0.0
    %412 = vmatprep.subr.mxu0 0.0
    %413 = vmatpush1.msra.mxu0 0.0
    %414 = vmatprep.subr.mxu0 0.0
    %415 = vmatpush1.msra.mxu0 0.0
    %416 = vmatprep.subr.mxu0 0.0
    %417 = vmatpush1.msra.mxu0 0.0
    %418 = vmatprep.subr.mxu0 0.0
    %419 = vmatpush1.msra.mxu0 0.0
    %420 = vmatprep.subr.mxu0 0.0
    %421 = vmatpush1.msra.mxu0 0.0
    %422 = vmatprep.subr.mxu0 0.0
    %423 = vmatpush1.msra.mxu0 0.0
    %424 = vmatprep.subr.mxu0 0.0
    %425 = vmatpush1.msra.mxu0 0.0
    %426 = vmatprep.subr.mxu0 0.0
    %427 = vmatpush1.msra.mxu0 0.0
    %428 = vmatprep.subr.mxu0 0.0
    %429 = vmatpush1.msra.mxu0 0.0
    %430 = vmatprep.subr.mxu0 0.0
    %431 = vmatpush1.msra.mxu0 0.0
    %432 = vmatprep.subr.mxu0 0.0
    %433 = vmatpush1.msra.mxu0 0.0
    %434 = vmatprep.subr.mxu0 0.0
    %435 = vmatpush1.msra.mxu0 0.0
    %436 = vmatprep.subr.mxu0 0.0
    %437 = vmatpush1.msra.mxu0 0.0
    %438 = vmatprep.subr.mxu0 0.0
    %439 = vmatpush1.msra.mxu0 0.0
    %440 = vmatprep.subr.mxu0 0.0
    %441 = vmatpush1.msra.mxu0 0.0
    %442 = vmatprep.mubr.f32.mxu0 0.0
    %443 = vmatmul.mubr.f32.gmra.mrb[0].mxu0 %v376
    %v444 = vpop.f32.mrb[0].mxu0
    %v445 = vadd.f32 %v373, %v444
    %v446 = vpop.f32.mrb[0].mxu0
    %447 = vdwg.mxu0
    %448 = vst [vmem:[#allocation5] sm:$0x1] %v445
    // Predicated region
    $region22: #{tpu_custom_call.1} parent=1 // pred_check
      _
    $region23: #{tpu_custom_call.1} parent=1 // pred_check_branch
      %450 = sbr.rel (0) target = $region25
    $region24: #{tpu_custom_call.1} parent=1 // pred_region
      %s452 = ssub.s32 16, 16
      %453 = vsyncadd [#allocation6], %s452
      %s455 = sshll.u32 [#allocation5], 4
      %s456 = int_to_ptr.vmem [resolvable:$true] %s455
      %458 = dma.vmem_to_hbm [thread:$0]  %s456, 16, %s6, [#allocation6]
    $region25: #{tpu_custom_call.1} parent=1 // pred_fallthru
      _
    // Predicated region
    $region26: #{tpu_custom_call.1} parent=1 // pred_check
      _
    $region27: #{tpu_custom_call.1} parent=1 // pred_check_branch
      %460 = sbr.rel (0) target = $region29
    $region28: #{tpu_custom_call.1} parent=1 // pred_region
      %461 = dma.done [#allocation6], 16
    $region29: #{tpu_custom_call.1} parent=1 // pred_fallthru
      _
    %462 = vsyncpa [#allocation6], 1

</llo_original>
